<compile_context>
chip_gen: v7x
topology: tpu7x:2x2x1
jax: 0.10.0
libtpu: 0.0.40
codegen_flags: <defaults>
</compile_context>

<pallas_src>
import jax
import jax.numpy as jnp
from jax.experimental import pallas as pl
from jax.experimental.pallas import tpu as pltpu


def mlp_kernel(x_ref, w1_ref, b1_ref, w2_ref, b2_ref, o_ref):
    # Layer 1: MXU matmul + VPU bias/ReLU on the (tb, H) tile.  x arrives in
    # its native dtype (halves HBM traffic for bf16 inputs); upcast in VMEM.
    x = x_ref[...].astype(jnp.float32)
    h = jnp.dot(x, w1_ref[...], preferred_element_type=jnp.float32)   # (tb, H)
    h = jnp.maximum(h + b1_ref[...], 0.0)                             # + (1, H)
    # Layer 2 (output width 1): VPU multiply + cross-lane reduce; keeps the
    # MXU free and avoids a 1/128-utilized result drain.
    z = jnp.sum(h * w2_ref[...], axis=-1)                             # (tb,)
    p = jax.nn.sigmoid(z + b2_ref[0])                                 # SMEM scalar bias
    # Lane-dense, (8,128)-aligned store: (tb,) -> (tb//128, 128) matches the
    # row-major 1-D layout, so the store is an unmasked full-vreg write.
    o_ref[...] = p.reshape(o_ref.shape)


def _pick_batch_tile(B, tb_request, d_in, hidden, x_itemsize):
    """Batch tile (rows) and padded batch size.

    Tiles are multiples of 1024 rows (-> (8,128)-legal output blocks), sized
    to amortize per-grid-step overhead, capped by a ~40 MiB VMEM budget, and
    capped so the grid has >= 2 steps when possible (v7x megacore sharding).
    """
    B128 = pl.cdiv(B, 128) * 128
    if B128 <= 1024:
        # Tiny batch: one tile; the output block equals the full array.
        return B128, B128

    # VMEM budget: x (double-buffered, lane-padded), h temporaries, out (x2).
    d_pad = pl.cdiv(d_in, 128) * 128
    h_pad = pl.cdiv(hidden, 128) * 128
    per_row = 2 * d_pad * x_itemsize + h_pad * 4 + 2 * 4
    tb_vmem = max(1024, ((40 * 1024 * 1024) // per_row) // 1024 * 1024)

    m = pl.cdiv(B128, 1024)                         # batch in 1024-row units
    k = max(1, min(tb_request // 1024, tb_vmem // 1024, m))
    k = min(k, max(1, m // 2))                      # >= 2 grid steps if possible
    tb = k * 1024
    return tb, pl.cdiv(B128, tb) * tb               # pads at most ~one tile


def two_layer_nn(x, w1, b1, w2, b2, *, tb=8192):
    """sigmoid(relu(x @ w1 + b1) @ w2 + b2); x: (B, D), w1: (D, H), w2: (H, 1)."""
    B, D = x.shape
    H = w1.shape[1]

    tb, B_pad = _pick_batch_tile(B, tb, D, H, x.dtype.itemsize)
    G = B_pad // tb

    if B_pad != B:
        # Bounded (< one tile); padded rows do harmless work and are sliced off.
        x = jnp.pad(x, ((0, B_pad - B), (0, 0)))

    b1_row = b1.reshape(1, H).astype(jnp.float32)
    w2_row = w2.reshape(1, H).astype(jnp.float32)   # (H, 1) -> (1, H) row
    b2_s = b2.reshape(1).astype(jnp.float32)        # scalar, lives in SMEM

    out = pl.pallas_call(
        mlp_kernel,
        out_shape=jax.ShapeDtypeStruct((B_pad // 128, 128), jnp.float32),
        grid=(G,),
        in_specs=[
            pl.BlockSpec((tb, D), lambda i: (i, 0)),              # x: pipelined tiles
            pl.BlockSpec((D, H), lambda i: (0, 0)),               # W1 resident
            pl.BlockSpec((1, H), lambda i: (0, 0)),               # b1 resident
            pl.BlockSpec((1, H), lambda i: (0, 0)),               # w2 row resident
            pl.BlockSpec(memory_space=pltpu.MemorySpace.SMEM),    # b2 scalar
        ],
        out_specs=pl.BlockSpec((tb // 128, 128), lambda i: (i, 0)),  # (8,128)-aligned slab
        compiler_params=pltpu.CompilerParams(
            dimension_semantics=("parallel",),
            vmem_limit_bytes=48 * 1024 * 1024,
        ),
    )(x, w1.astype(jnp.float32), b1_row, w2_row, b2_s)

    # (B_pad//128, 128) slab -> (B, 1), dropping any batch padding.
    return out.reshape(B_pad, 1)[:B]


if __name__ == "__main__":
    key = jax.random.PRNGKey(0)
    batch = 8
    input_dim = 16
    hidden_dim = 32

    kx, k1, kb1, k2, kb2, kx2 = jax.random.split(key, 6)
    x = jax.random.normal(kx, (batch, input_dim), dtype=jnp.float32)

    # Shapes match nn.Linear(input_dim, hidden_dim) / nn.Linear(hidden_dim, 1)
    # (weights stored pre-transposed as [in, out]).
    w1 = jax.random.normal(k1, (input_dim, hidden_dim), dtype=jnp.float32) * 0.1
    b1 = jax.random.normal(kb1, (1, hidden_dim), dtype=jnp.float32) * 0.1
    w2 = jax.random.normal(k2, (hidden_dim, 1), dtype=jnp.float32) * 0.1
    b2 = jax.random.normal(kb2, (1, 1), dtype=jnp.float32) * 0.1

    out = two_layer_nn(x, w1, b1, w2, b2)
    jax.block_until_ready(out)

    ref = jax.nn.sigmoid(jnp.maximum(x @ w1 + b1, 0.0) @ w2 + b2)
    assert out.shape == (batch, 1)
    assert jnp.allclose(out, ref, atol=1e-5), "mismatch vs reference (G=1)"

    # Multi-tile path (G > 1): exercises the (8,128)-aligned output blocks and
    # the padded ragged tail flagged in review.  Still tiny (2304 x 16 f32).
    x2 = jax.random.normal(kx2, (2304, input_dim), dtype=jnp.float32)
    out2 = two_layer_nn(x2, w1, b1, w2, b2, tb=1024)
    jax.block_until_ready(out2)
    ref2 = jax.nn.sigmoid(jnp.maximum(x2 @ w1 + b1, 0.0) @ w2 + b2)
    assert out2.shape == (2304, 1)
    assert jnp.allclose(out2, ref2, atol=1e-5), "mismatch vs reference (G>1)"

    print("KERNEL_OK")
</pallas_src>

<mosaic_0001>
module attributes {stable_mosaic.version = 11 : i64} {
  func.func @mlp_kernel(%arg0: i32, %arg1: memref<128x16xf32, #tpu.memory_space<vmem>>, %arg2: memref<16x32xf32, #tpu.memory_space<vmem>>, %arg3: memref<1x32xf32, #tpu.memory_space<vmem>>, %arg4: memref<1x32xf32, #tpu.memory_space<vmem>>, %arg5: memref<1xf32, #tpu.memory_space<smem>>, %arg6: memref<1x128xf32, #tpu.memory_space<vmem>>) attributes {dimension_semantics = [#tpu.dimension_semantics<parallel>], iteration_bounds = array<i64: 1>, scalar_prefetch = 0 : i64, scratch_operands = 0 : i64, tpu.core_type = #tpu.core_type<tc>, window_params = [{transform_indices = @transform_0, window_bounds = array<i64: 128, 16>}, {pipeline_mode = #tpu.pipeline_mode<synchronous>, transform_indices = @transform_1, window_bounds = array<i64: 16, 32>}, {pipeline_mode = #tpu.pipeline_mode<synchronous>, transform_indices = @transform_2, window_bounds = array<i64: 1, 32>}, {pipeline_mode = #tpu.pipeline_mode<synchronous>, transform_indices = @transform_3, window_bounds = array<i64: 1, 32>}, {transform_indices = @transform_4, window_bounds = array<i64: 1>}, {transform_indices = @transform_5, window_bounds = array<i64: 1, 128>}]} {
    %c0 = arith.constant 0 : index
    %c0_0 = arith.constant 0 : index
    %0 = vector.load %arg1[%c0, %c0_0] : memref<128x16xf32, #tpu.memory_space<vmem>>, vector<128x16xf32>
    %c0_1 = arith.constant 0 : index
    %c0_2 = arith.constant 0 : index
    %1 = vector.load %arg2[%c0_1, %c0_2] : memref<16x32xf32, #tpu.memory_space<vmem>>, vector<16x32xf32>
    %cst = arith.constant dense<0.000000e+00> : vector<128x32xf32>
    %2 = tpu.matmul %0, %1, %cst {dimension_numbers = #tpu.dot_dimension_numbers<[1], [0], [0], [1], [0, 0, 1, 1], [], []>} : vector<128x16xf32>, vector<16x32xf32>, vector<128x32xf32> -> vector<128x32xf32>
    %c0_3 = arith.constant 0 : index
    %c0_4 = arith.constant 0 : index
    %3 = vector.load %arg3[%c0_3, %c0_4] : memref<1x32xf32, #tpu.memory_space<vmem>>, vector<1x32xf32>
    %4 = vector.broadcast %3 : vector<1x32xf32> to vector<128x32xf32>
    %5 = arith.addf %2, %4 : vector<128x32xf32>
    %cst_5 = arith.constant 0.000000e+00 : f32
    %6 = vector.broadcast %cst_5 : f32 to vector<128x32xf32>
    %7 = arith.maximumf %5, %6 : vector<128x32xf32>
    %c0_6 = arith.constant 0 : index
    %c0_7 = arith.constant 0 : index
    %8 = vector.load %arg4[%c0_6, %c0_7] : memref<1x32xf32, #tpu.memory_space<vmem>>, vector<1x32xf32>
    %9 = vector.broadcast %8 : vector<1x32xf32> to vector<128x32xf32>
    %10 = arith.mulf %7, %9 : vector<128x32xf32>
    %cst_8 = arith.constant dense<0.000000e+00> : vector<128xf32>
    %11 = vector.multi_reduction <add>, %10, %cst_8 [1] : vector<128x32xf32> to vector<128xf32>
    %c0_9 = arith.constant 0 : index
    %12 = memref.load %arg5[%c0_9] : memref<1xf32, #tpu.memory_space<smem>>
    %13 = vector.broadcast %12 : f32 to vector<128xf32>
    %14 = arith.addf %11, %13 : vector<128xf32>
    %15 = arith.negf %14 : vector<128xf32>
    %16 = math.exp %15 : vector<128xf32>
    %cst_10 = arith.constant 1.000000e+00 : f32
    %17 = vector.broadcast %cst_10 : f32 to vector<128xf32>
    %18 = arith.addf %17, %16 : vector<128xf32>
    %19 = arith.divf %17, %18 : vector<128xf32>
    %20 = vector.shape_cast %19 : vector<128xf32> to vector<1x128xf32>
    %c0_11 = arith.constant 0 : index
    %c0_12 = arith.constant 0 : index
    %21 = vector.load %arg6[%c0_11, %c0_12] : memref<1x128xf32, #tpu.memory_space<vmem>>, vector<1x128xf32>
    tpu.vector_store %arg6[%c0_11, %c0_12], %20 {strides = array<i32>} : memref<1x128xf32, #tpu.memory_space<vmem>>, vector<1x128xf32>,
    return
  }
  func.func @transform_0(%arg0: i32) -> (i32, i32) {
    %c0_i32 = arith.constant 0 : i32
    %c0_i32_0 = arith.constant 0 : i32
    return %arg0, %c0_i32 : i32, i32
  }
  func.func @transform_1(%arg0: i32) -> (i32, i32) {
    %c0_i32 = arith.constant 0 : i32
    %c0_i32_0 = arith.constant 0 : i32
    %c0_i32_1 = arith.constant 0 : i32
    return %c0_i32, %c0_i32_0 : i32, i32
  }
  func.func @transform_2(%arg0: i32) -> (i32, i32) {
    %c0_i32 = arith.constant 0 : i32
    %c0_i32_0 = arith.constant 0 : i32
    %c0_i32_1 = arith.constant 0 : i32
    return %c0_i32, %c0_i32_0 : i32, i32
  }
  func.func @transform_3(%arg0: i32) -> (i32, i32) {
    %c0_i32 = arith.constant 0 : i32
    %c0_i32_0 = arith.constant 0 : i32
    %c0_i32_1 = arith.constant 0 : i32
    return %c0_i32, %c0_i32_0 : i32, i32
  }
  func.func @transform_4(%arg0: i32) -> i32 {
    %c0_i32 = arith.constant 0 : i32
    %c0_i32_0 = arith.constant 0 : i32
    return %c0_i32 : i32
  }
  func.func @transform_5(%arg0: i32) -> (i32, i32) {
    %c0_i32 = arith.constant 0 : i32
    %c0_i32_0 = arith.constant 0 : i32
    return %arg0, %c0_i32 : i32, i32
  }
}

</mosaic_0001>

<llo_original>
// kernel: tpu_custom_call.1
$region0: #{tpu_custom_call.1}
  #allocation0 [shape = 'u32[]', space=smem, size = 0x4, offset = 0x4, fixed_abs, tag = 'smem constant byte address 0x4 - core index']
  #allocation1 [shape = 'u32[144,128]{1,0:T(1,128)}', space=vmem, size = 0x12000, scoped, tag = 'internal scratch']
  #allocation2 [shape = 'f32[1]{0:T(128)S(6)}', space=smem, size = 0x200, scoped, tag = 'scoped memory for tpu_custom_call.1']
  %s0 = inlined_call_operand.vmem [shape: f32[128,16], index: 0, kind: input, shape index: {}]
  %s1 = inlined_call_operand.vmem [shape: f32[16,32], index: 1, kind: input, shape index: {}]
  %s2 = inlined_call_operand.vmem [shape: f32[1,32], index: 2, kind: input, shape index: {}]
  %s3 = inlined_call_operand.vmem [shape: f32[1,32], index: 3, kind: input, shape index: {}]
  %s4 = inlined_call_operand.<no memory space> [shape: f32[1], index: 4, kind: input, shape index: {}]
  %s5 = inlined_call_operand.hbm [shape: f32[1,128], index: 5, kind: output, shape index: {}]
  %s6 = sld [smem:[#allocation0]]
  $region30: #{tpu_custom_call.1} parent=0
    _
  %s8 = ssub.s32 1, %s6
  %s9 = scalar_select 0, %s8, %s6
  %10 = sst [smem:[#allocation2]] %s4
  $region1: #{tpu_custom_call.1} parent=0
    #allocation3 [shape = 'u8[512]{0}', space=vmem, size = 0x400, scoped, tag = 'output window, operand 0, single buffered']
    #allocation4 [shape = 's32[1]{0}', space=sflag, size = 0x4, scoped, tag = 'scoped memory for tpu_custom_call.1']
    %11 = vsyncpa [#allocation4], 0
    // Predicated region
    $region2: #{tpu_custom_call.1} parent=1 // pred_check
      _
    $region3: #{tpu_custom_call.1} parent=1 // pred_check_branch
      %13 = sbr.rel (0) target = $region5
    $region4: #{tpu_custom_call.1} parent=1 // pred_region
      _
    $region5: #{tpu_custom_call.1} parent=1 // pred_fallthru
      _
    // Predicated region
    $region6: #{tpu_custom_call.1} parent=1 // pred_check
      _
    $region7: #{tpu_custom_call.1} parent=1 // pred_check_branch
      %15 = sbr.rel (0) target = $region9
    $region8: #{tpu_custom_call.1} parent=1 // pred_region
      _
    $region9: #{tpu_custom_call.1} parent=1 // pred_fallthru
      _
    // Predicated region
    $region10: #{tpu_custom_call.1} parent=1 // pred_check
      _
    $region11: #{tpu_custom_call.1} parent=1 // pred_check_branch
      %17 = sbr.rel (0) target = $region13
    $region12: #{tpu_custom_call.1} parent=1 // pred_region
      _
    $region13: #{tpu_custom_call.1} parent=1 // pred_fallthru
      _
    // Predicated region
    $region14: #{tpu_custom_call.1} parent=1 // pred_check
      _
    $region15: #{tpu_custom_call.1} parent=1 // pred_check_branch
      %19 = sbr.rel (0) target = $region17
    $region16: #{tpu_custom_call.1} parent=1 // pred_region
      _
    $region17: #{tpu_custom_call.1} parent=1 // pred_fallthru
      _
    // Predicated region
    $region18: #{tpu_custom_call.1} parent=1 // pred_check
      _
    $region19: #{tpu_custom_call.1} parent=1 // pred_check_branch
      %21 = sbr.rel (0) target = $region21
    $region20: #{tpu_custom_call.1} parent=1 // pred_region
      _
    $region21: #{tpu_custom_call.1} parent=1 // pred_fallthru
      _
    %v22 = vld [vmem:[%s0] sm:$0xff]
    %v23 = vld [vmem:[%s0 + $0x8] sm:$0xff]
    %v24 = vld [vmem:[%s0 + $0x10] sm:$0xff]
    %v25 = vld [vmem:[%s0 + $0x18] sm:$0xff]
    %v26 = vld [vmem:[%s0 + $0x20] sm:$0xff]
    %v27 = vld [vmem:[%s0 + $0x28] sm:$0xff]
    %v28 = vld [vmem:[%s0 + $0x30] sm:$0xff]
    %v29 = vld [vmem:[%s0 + $0x38] sm:$0xff]
    %v30 = vld [vmem:[%s0 + $0x40] sm:$0xff]
    %v31 = vld [vmem:[%s0 + $0x48] sm:$0xff]
    %v32 = vld [vmem:[%s0 + $0x50] sm:$0xff]
    %v33 = vld [vmem:[%s0 + $0x58] sm:$0xff]
    %v34 = vld [vmem:[%s0 + $0x60] sm:$0xff]
    %v35 = vld [vmem:[%s0 + $0x68] sm:$0xff]
    %v36 = vld [vmem:[%s0 + $0x70] sm:$0xff]
    %v37 = vld [vmem:[%s0 + $0x78] sm:$0xff]
    %v38 = vld [vmem:[%s1] sm:$0xff]
    %v39 = vld [vmem:[%s1 + $0x8] sm:$0xff]
    %v40 = vld [vmem:[%s2] sm:$0x1]
    %v42 = vlaneseq
    %v43 = vshrl.u32 %v42, 7
    %v44 = vsub.s32 0, %v43
    %v45 = vrot.slane %v40, %v44
    %vm47 = vcmask 130048
    %v49 = vsel %vm47, %v22, 0
    %v52 = vsel %vm47, %v23, 0
    %v55 = vsel %vm47, %v24, 0
    %v58 = vsel %vm47, %v25, 0
    %v61 = vsel %vm47, %v26, 0
    %v64 = vsel %vm47, %v27, 0
    %v67 = vsel %vm47, %v28, 0
    %v70 = vsel %vm47, %v29, 0
    %v73 = vsel %vm47, %v30, 0
    %v76 = vsel %vm47, %v31, 0
    %v79 = vsel %vm47, %v32, 0
    %v82 = vsel %vm47, %v33, 0
    %v85 = vsel %vm47, %v34, 0
    %v88 = vsel %vm47, %v35, 0
    %v91 = vsel %vm47, %v36, 0
    %v94 = vsel %vm47, %v37, 0
    %96 = vmatprep.subr.mxu0 0.0
    %97 = vmatpush1.msra.mxu0 %v38
    %98 = vmatprep.subr.mxu0 0.0
    %99 = vmatpush1.msra.mxu0 %v39
    %100 = vmatprep.subr.mxu0 0.0
    %101 = vmatpush1.msra.mxu0 0.0
    %102 = vmatprep.subr.mxu0 0.0
    %103 = vmatpush1.msra.mxu0 0.0
    %104 = vmatprep.subr.mxu0 0.0
    %105 = vmatpush1.msra.mxu0 0.0
    %106 = vmatprep.subr.mxu0 0.0
    %107 = vmatpush1.msra.mxu0 0.0
    %108 = vmatprep.subr.mxu0 0.0
    %109 = vmatpush1.msra.mxu0 0.0
    %110 = vmatprep.subr.mxu0 0.0
    %111 = vmatpush1.msra.mxu0 0.0
    %112 = vmatprep.subr.mxu0 0.0
    %113 = vmatpush1.msra.mxu0 0.0
    %114 = vmatprep.subr.mxu0 0.0
    %115 = vmatpush1.msra.mxu0 0.0
    %116 = vmatprep.subr.mxu0 0.0
    %117 = vmatpush1.msra.mxu0 0.0
    %118 = vmatprep.subr.mxu0 0.0
    %119 = vmatpush1.msra.mxu0 0.0
    %120 = vmatprep.subr.mxu0 0.0
    %121 = vmatpush1.msra.mxu0 0.0
    %122 = vmatprep.subr.mxu0 0.0
    %123 = vmatpush1.msra.mxu0 0.0
    %124 = vmatprep.subr.mxu0 0.0
    %125 = vmatpush1.msra.mxu0 0.0
    %126 = vmatprep.subr.mxu0 0.0
    %127 = vmatpush1.msra.mxu0 0.0
    %128 = vmatprep.subr.mxu0 0.0
    %129 = vmatpush1.msra.mxu0 0.0
    %130 = vmatprep.subr.mxu0 0.0
    %131 = vmatpush1.msra.mxu0 0.0
    %132 = vmatprep.subr.mxu0 0.0
    %133 = vmatpush1.msra.mxu0 0.0
    %134 = vmatprep.subr.mxu0 0.0
    %135 = vmatpush1.msra.mxu0 0.0
    %136 = vmatprep.subr.mxu0 0.0
    %137 = vmatpush1.msra.mxu0 0.0
    %138 = vmatprep.subr.mxu0 0.0
    %139 = vmatpush1.msra.mxu0 0.0
    %140 = vmatprep.subr.mxu0 0.0
    %141 = vmatpush1.msra.mxu0 0.0
    %142 = vmatprep.subr.mxu0 0.0
    %143 = vmatpush1.msra.mxu0 0.0
    %144 = vmatprep.subr.mxu0 0.0
    %145 = vmatpush1.msra.mxu0 0.0
    %146 = vmatprep.subr.mxu0 0.0
    %147 = vmatpush1.msra.mxu0 0.0
    %148 = vmatprep.subr.mxu0 0.0
    %149 = vmatpush1.msra.mxu0 0.0
    %150 = vmatprep.subr.mxu0 0.0
    %151 = vmatpush1.msra.mxu0 0.0
    %152 = vmatprep.subr.mxu0 0.0
    %153 = vmatpush1.msra.mxu0 0.0
    %154 = vmatprep.subr.mxu0 0.0
    %155 = vmatpush1.msra.mxu0 0.0
    %156 = vmatprep.subr.mxu0 0.0
    %157 = vmatpush1.msra.mxu0 0.0
    %158 = vmatprep.subr.mxu0 0.0
    %159 = vmatpush1.msra.mxu0 0.0
    %160 = vmatprep.mubr.f32.mxu0 0.0
    %161 = vmatmul.mubr.f32.gmra.mrb[0].mxu0 %v49
    %v162 = vpop.f32.mrb[0].mxu0
    %v163 = vadd.f32 %v45, %v162
    %v164 = vpop.f32.mrb[0].mxu0
    %165 = vmatprep.mubr.f32.mxu0 0.0
    %166 = vmatmul.mubr.f32.gmra.mrb[0].mxu0 %v52
    %v167 = vpop.f32.mrb[0].mxu0
    %v168 = vadd.f32 %v45, %v167
    %v169 = vpop.f32.mrb[0].mxu0
    %170 = vmatprep.mubr.f32.mxu0 0.0
    %171 = vmatmul.mubr.f32.gmra.mrb[0].mxu0 %v55
    %v172 = vpop.f32.mrb[0].mxu0
    %v173 = vadd.f32 %v45, %v172
    %v174 = vpop.f32.mrb[0].mxu0
    %175 = vmatprep.mubr.f32.mxu0 0.0
    %176 = vmatmul.mubr.f32.gmra.mrb[0].mxu0 %v58
    %v177 = vpop.f32.mrb[0].mxu0
    %v178 = vadd.f32 %v45, %v177
    %v179 = vpop.f32.mrb[0].mxu0
    %180 = vmatprep.mubr.f32.mxu0 0.0
    %181 = vmatmul.mubr.f32.gmra.mrb[0].mxu0 %v61
    %v182 = vpop.f32.mrb[0].mxu0
    %v183 = vadd.f32 %v45, %v182
    %v184 = vpop.f32.mrb[0].mxu0
    %185 = vmatprep.mubr.f32.mxu0 0.0
    %186 = vmatmul.mubr.f32.gmra.mrb[0].mxu0 %v64
    %v187 = vpop.f32.mrb[0].mxu0
    %v188 = vadd.f32 %v45, %v187
    %v189 = vpop.f32.mrb[0].mxu0
    %190 = vmatprep.mubr.f32.mxu0 0.0
    %191 = vmatmul.mubr.f32.gmra.mrb[0].mxu0 %v67
    %v192 = vpop.f32.mrb[0].mxu0
    %v193 = vadd.f32 %v45, %v192
    %v194 = vpop.f32.mrb[0].mxu0
    %195 = vmatprep.mubr.f32.mxu0 0.0
    %196 = vmatmul.mubr.f32.gmra.mrb[0].mxu0 %v70
    %v197 = vpop.f32.mrb[0].mxu0
    %v198 = vadd.f32 %v45, %v197
    %v199 = vpop.f32.mrb[0].mxu0
    %200 = vmatprep.mubr.f32.mxu0 0.0
    %201 = vmatmul.mubr.f32.gmra.mrb[0].mxu0 %v73
    %v202 = vpop.f32.mrb[0].mxu0
    %v203 = vadd.f32 %v45, %v202
    %v204 = vpop.f32.mrb[0].mxu0
    %205 = vmatprep.mubr.f32.mxu0 0.0
    %206 = vmatmul.mubr.f32.gmra.mrb[0].mxu0 %v76
    %v207 = vpop.f32.mrb[0].mxu0
    %v208 = vadd.f32 %v45, %v207
    %v209 = vpop.f32.mrb[0].mxu0
    %210 = vmatprep.mubr.f32.mxu0 0.0
    %211 = vmatmul.mubr.f32.gmra.mrb[0].mxu0 %v79
    %v212 = vpop.f32.mrb[0].mxu0
    %v213 = vadd.f32 %v45, %v212
    %v214 = vpop.f32.mrb[0].mxu0
    %215 = vmatprep.mubr.f32.mxu0 0.0
    %216 = vmatmul.mubr.f32.gmra.mrb[0].mxu0 %v82
    %v217 = vpop.f32.mrb[0].mxu0
    %v218 = vadd.f32 %v45, %v217
    %v219 = vpop.f32.mrb[0].mxu0
    %220 = vmatprep.mubr.f32.mxu0 0.0
    %221 = vmatmul.mubr.f32.gmra.mrb[0].mxu0 %v85
    %v222 = vpop.f32.mrb[0].mxu0
    %v223 = vadd.f32 %v45, %v222
    %v224 = vpop.f32.mrb[0].mxu0
    %225 = vmatprep.mubr.f32.mxu0 0.0
    %226 = vmatmul.mubr.f32.gmra.mrb[0].mxu0 %v88
    %v227 = vpop.f32.mrb[0].mxu0
    %v228 = vadd.f32 %v45, %v227
    %v229 = vpop.f32.mrb[0].mxu0
    %230 = vmatprep.mubr.f32.mxu0 0.0
    %231 = vmatmul.mubr.f32.gmra.mrb[0].mxu0 %v91
    %v232 = vpop.f32.mrb[0].mxu0
    %v233 = vadd.f32 %v45, %v232
    %v234 = vpop.f32.mrb[0].mxu0
    %235 = vmatprep.mubr.f32.mxu0 0.0
    %236 = vmatmul.mubr.f32.gmra.mrb[0].mxu0 %v94
    %v237 = vpop.f32.mrb[0].mxu0
    %v238 = vadd.f32 %v45, %v237
    %v239 = vpop.f32.mrb[0].mxu0
    %240 = vdwg.mxu0
    %v241 = vmax.f32 %v163, 0.0
    %v242 = vmax.f32 %v168, 0.0
    %v243 = vmax.f32 %v173, 0.0
    %v244 = vmax.f32 %v178, 0.0
    %v245 = vmax.f32 %v183, 0.0
    %v246 = vmax.f32 %v188, 0.0
    %v247 = vmax.f32 %v193, 0.0
    %v248 = vmax.f32 %v198, 0.0
    %v249 = vmax.f32 %v203, 0.0
    %v250 = vmax.f32 %v208, 0.0
    %v251 = vmax.f32 %v213, 0.0
    %v252 = vmax.f32 %v218, 0.0
    %v253 = vmax.f32 %v223, 0.0
    %v254 = vmax.f32 %v228, 0.0
    %v255 = vmax.f32 %v233, 0.0
    %v256 = vmax.f32 %v238, 0.0
    %v257 = vld [vmem:[%s3] sm:$0x1]
    %v259 = vlaneseq
    %v260 = vshrl.u32 %v259, 7
    %v261 = vsub.s32 0, %v260
    %v262 = vrot.slane %v257, %v261
    %v264 = vmul.f32 %v241, %v262
    %v265 = vmul.f32 %v242, %v262
    %v266 = vmul.f32 %v243, %v262
    %v267 = vmul.f32 %v244, %v262
    %v268 = vmul.f32 %v245, %v262
    %v269 = vmul.f32 %v246, %v262
    %v270 = vmul.f32 %v247, %v262
    %v271 = vmul.f32 %v248, %v262
    %v272 = vmul.f32 %v249, %v262
    %v273 = vmul.f32 %v250, %v262
    %v274 = vmul.f32 %v251, %v262
    %v275 = vmul.f32 %v252, %v262
    %v276 = vmul.f32 %v253, %v262
    %v277 = vmul.f32 %v254, %v262
    %v278 = vmul.f32 %v255, %v262
    %v279 = vmul.f32 %v256, %v262
    %vm280 = vcmask 261120
    %v281 = vsel %vm280, %v264, 0.0
    %282 = vadd.xlane.f32.xlu0 %v281
    %v283 = vpop.xlane.xlu0 %282
    %v284 = vsel %vm280, %v265, 0.0
    %285 = vadd.xlane.f32.xlu0 %v284
    %v286 = vpop.xlane.xlu0 %285
    %v287 = vsel %vm280, %v266, 0.0
    %288 = vadd.xlane.f32.xlu0 %v287
    %v289 = vpop.xlane.xlu0 %288
    %v290 = vsel %vm280, %v267, 0.0
    %291 = vadd.xlane.f32.xlu0 %v290
    %v292 = vpop.xlane.xlu0 %291
    %v293 = vsel %vm280, %v268, 0.0
    %294 = vadd.xlane.f32.xlu0 %v293
    %v295 = vpop.xlane.xlu0 %294
    %v296 = vsel %vm280, %v269, 0.0
    %297 = vadd.xlane.f32.xlu0 %v296
    %v298 = vpop.xlane.xlu0 %297
    %v299 = vsel %vm280, %v270, 0.0
    %300 = vadd.xlane.f32.xlu0 %v299
    %v301 = vpop.xlane.xlu0 %300
    %v302 = vsel %vm280, %v271, 0.0
    %303 = vadd.xlane.f32.xlu0 %v302
    %v304 = vpop.xlane.xlu0 %303
    %v305 = vsel %vm280, %v272, 0.0
    %306 = vadd.xlane.f32.xlu0 %v305
    %v307 = vpop.xlane.xlu0 %306
    %v308 = vsel %vm280, %v273, 0.0
    %309 = vadd.xlane.f32.xlu0 %v308
    %v310 = vpop.xlane.xlu0 %309
    %v311 = vsel %vm280, %v274, 0.0
    %312 = vadd.xlane.f32.xlu0 %v311
    %v313 = vpop.xlane.xlu0 %312
    %v314 = vsel %vm280, %v275, 0.0
    %315 = vadd.xlane.f32.xlu0 %v314
    %v316 = vpop.xlane.xlu0 %315
    %v317 = vsel %vm280, %v276, 0.0
    %318 = vadd.xlane.f32.xlu0 %v317
    %v319 = vpop.xlane.xlu0 %318
    %v320 = vsel %vm280, %v277, 0.0
    %321 = vadd.xlane.f32.xlu0 %v320
    %v322 = vpop.xlane.xlu0 %321
    %v323 = vsel %vm280, %v278, 0.0
    %324 = vadd.xlane.f32.xlu0 %v323
    %v325 = vpop.xlane.xlu0 %324
    %v326 = vsel %vm280, %v279, 0.0
    %327 = vadd.xlane.f32.xlu0 %v326
    %v328 = vpop.xlane.xlu0 %327
    %s329 = sld [smem:[#allocation2]]
    %v330 = vstv %s329
    %v331 = vadd.f32 %v283, %v330
    %v332 = vadd.f32 %v286, %v330
    %v333 = vadd.f32 %v289, %v330
    %v334 = vadd.f32 %v292, %v330
    %v335 = vadd.f32 %v295, %v330
    %v336 = vadd.f32 %v298, %v330
    %v337 = vadd.f32 %v301, %v330
    %v338 = vadd.f32 %v304, %v330
    %v339 = vadd.f32 %v307, %v330
    %v340 = vadd.f32 %v310, %v330
    %v341 = vadd.f32 %v313, %v330
    %v342 = vadd.f32 %v316, %v330
    %v343 = vadd.f32 %v319, %v330
    %v344 = vadd.f32 %v322, %v330
    %v345 = vadd.f32 %v325, %v330
    %v346 = vadd.f32 %v328, %v330
    %v347 = vxor.u32 %v331, 2147483648
    %v348 = vxor.u32 %v332, 2147483648
    %v349 = vxor.u32 %v333, 2147483648
    %v350 = vxor.u32 %v334, 2147483648
    %v351 = vxor.u32 %v335, 2147483648
    %v352 = vxor.u32 %v336, 2147483648
    %v353 = vxor.u32 %v337, 2147483648
    %v354 = vxor.u32 %v338, 2147483648
    %v355 = vxor.u32 %v339, 2147483648
    %v356 = vxor.u32 %v340, 2147483648
    %v357 = vxor.u32 %v341, 2147483648
    %v358 = vxor.u32 %v342, 2147483648
    %v359 = vxor.u32 %v343, 2147483648
    %v360 = vxor.u32 %v344, 2147483648
    %v361 = vxor.u32 %v345, 2147483648
    %v362 = vxor.u32 %v346, 2147483648
    %v363 = vmul.f32 %v347, 1.442695
    %v364 = vpow.pop %v363
    %v365 = vmul.f32 %v348, 1.442695
    %v366 = vpow.pop %v365
    %v367 = vmul.f32 %v349, 1.442695
    %v368 = vpow.pop %v367
    %v369 = vmul.f32 %v350, 1.442695
    %v370 = vpow.pop %v369
    %v371 = vmul.f32 %v351, 1.442695
    %v372 = vpow.pop %v371
    %v373 = vmul.f32 %v352, 1.442695
    %v374 = vpow.pop %v373
    %v375 = vmul.f32 %v353, 1.442695
    %v376 = vpow.pop %v375
    %v377 = vmul.f32 %v354, 1.442695
    %v378 = vpow.pop %v377
    %v379 = vmul.f32 %v355, 1.442695
    %v380 = vpow.pop %v379
    %v381 = vmul.f32 %v356, 1.442695
    %v382 = vpow.pop %v381
    %v383 = vmul.f32 %v357, 1.442695
    %v384 = vpow.pop %v383
    %v385 = vmul.f32 %v358, 1.442695
    %v386 = vpow.pop %v385
    %v387 = vmul.f32 %v359, 1.442695
    %v388 = vpow.pop %v387
    %v389 = vmul.f32 %v360, 1.442695
    %v390 = vpow.pop %v389
    %v391 = vmul.f32 %v361, 1.442695
    %v392 = vpow.pop %v391
    %v393 = vmul.f32 %v362, 1.442695
    %v394 = vpow.pop %v393
    %v395 = vadd.f32 %v364, 1.0
    %v396 = vadd.f32 %v366, 1.0
    %v397 = vadd.f32 %v368, 1.0
    %v398 = vadd.f32 %v370, 1.0
    %v399 = vadd.f32 %v372, 1.0
    %v400 = vadd.f32 %v374, 1.0
    %v401 = vadd.f32 %v376, 1.0
    %v402 = vadd.f32 %v378, 1.0
    %v403 = vadd.f32 %v380, 1.0
    %v404 = vadd.f32 %v382, 1.0
    %v405 = vadd.f32 %v384, 1.0
    %v406 = vadd.f32 %v386, 1.0
    %v407 = vadd.f32 %v388, 1.0
    %v408 = vadd.f32 %v390, 1.0
    %v409 = vadd.f32 %v392, 1.0
    %v410 = vadd.f32 %v394, 1.0
    %v411 = vrcp.pop %v395
    %v412 = vmul.f32 1.0, %v411
    %v413 = vrcp.pop %v396
    %v414 = vmul.f32 1.0, %v413
    %v415 = vrcp.pop %v397
    %v416 = vmul.f32 1.0, %v415
    %v417 = vrcp.pop %v398
    %v418 = vmul.f32 1.0, %v417
    %v419 = vrcp.pop %v399
    %v420 = vmul.f32 1.0, %v419
    %v421 = vrcp.pop %v400
    %v422 = vmul.f32 1.0, %v421
    %v423 = vrcp.pop %v401
    %v424 = vmul.f32 1.0, %v423
    %v425 = vrcp.pop %v402
    %v426 = vmul.f32 1.0, %v425
    %v427 = vrcp.pop %v403
    %v428 = vmul.f32 1.0, %v427
    %v429 = vrcp.pop %v404
    %v430 = vmul.f32 1.0, %v429
    %v431 = vrcp.pop %v405
    %v432 = vmul.f32 1.0, %v431
    %v433 = vrcp.pop %v406
    %v434 = vmul.f32 1.0, %v433
    %v435 = vrcp.pop %v407
    %v436 = vmul.f32 1.0, %v435
    %v437 = vrcp.pop %v408
    %v438 = vmul.f32 1.0, %v437
    %v439 = vrcp.pop %v409
    %v440 = vmul.f32 1.0, %v439
    %v441 = vrcp.pop %v410
    %v442 = vmul.f32 1.0, %v441
    %v459 = vlaneseq
    %v460 = vand.u32 %v459, 127
    %v461 = vlaneseq
    %v462 = vshrl.u32 %v461, 7
    %v463 = vsub.s32 %v460, %v462
    %v464 = vrot.slane %v412, %v463
    %v465 = vadd.s32 %v460, 4294967288
    %v466 = vlaneseq
    %v467 = vshrl.u32 %v466, 7
    %v468 = vsub.s32 %v465, %v467
    %v469 = vrot.slane %v414, %v468
    %vm470 = vcmask 130112
    %v471 = vsel %vm470, %v469, %v464
    %v472 = vadd.s32 %v460, 4294967280
    %v473 = vlaneseq
    %v474 = vshrl.u32 %v473, 7
    %v475 = vsub.s32 %v472, %v474
    %v476 = vrot.slane %v416, %v475
    %vm477 = vcmask 195712
    %v478 = vsel %vm477, %v476, %v471
    %v479 = vadd.s32 %v460, 4294967272
    %v480 = vlaneseq
    %v481 = vshrl.u32 %v480, 7
    %v482 = vsub.s32 %v479, %v481
    %v483 = vrot.slane %v418, %v482
    %vm484 = vcmask 261312
    %v485 = vsel %vm484, %v483, %v478
    %v486 = vadd.s32 %v460, 4294967264
    %v487 = vlaneseq
    %v488 = vshrl.u32 %v487, 7
    %v489 = vsub.s32 %v486, %v488
    %v490 = vrot.slane %v420, %v489
    %vm491 = vcmask 326912
    %v492 = vsel %vm491, %v490, %v485
    %v493 = vadd.s32 %v460, 4294967256
    %v494 = vlaneseq
    %v495 = vshrl.u32 %v494, 7
    %v496 = vsub.s32 %v493, %v495
    %v497 = vrot.slane %v422, %v496
    %vm498 = vcmask 392512
    %v499 = vsel %vm498, %v497, %v492
    %v500 = vadd.s32 %v460, 4294967248
    %v501 = vlaneseq
    %v502 = vshrl.u32 %v501, 7
    %v503 = vsub.s32 %v500, %v502
    %v504 = vrot.slane %v424, %v503
    %vm505 = vcmask 458112
    %v506 = vsel %vm505, %v504, %v499
    %v507 = vadd.s32 %v460, 4294967240
    %v508 = vlaneseq
    %v509 = vshrl.u32 %v508, 7
    %v510 = vsub.s32 %v507, %v509
    %v511 = vrot.slane %v426, %v510
    %vm512 = vcmask 523712
    %v513 = vsel %vm512, %v511, %v506
    %v514 = vadd.s32 %v460, 4294967232
    %v515 = vlaneseq
    %v516 = vshrl.u32 %v515, 7
    %v517 = vsub.s32 %v514, %v516
    %v518 = vrot.slane %v428, %v517
    %vm519 = vcmask 589312
    %v520 = vsel %vm519, %v518, %v513
    %v521 = vadd.s32 %v460, 4294967224
    %v522 = vlaneseq
    %v523 = vshrl.u32 %v522, 7
    %v524 = vsub.s32 %v521, %v523
    %v525 = vrot.slane %v430, %v524
    %vm526 = vcmask 654912
    %v527 = vsel %vm526, %v525, %v520
    %v528 = vadd.s32 %v460, 4294967216
    %v529 = vlaneseq
    %v530 = vshrl.u32 %v529, 7
    %v531 = vsub.s32 %v528, %v530
    %v532 = vrot.slane %v432, %v531
    %vm533 = vcmask 720512
    %v534 = vsel %vm533, %v532, %v527
    %v535 = vadd.s32 %v460, 4294967208
    %v536 = vlaneseq
    %v537 = vshrl.u32 %v536, 7
    %v538 = vsub.s32 %v535, %v537
    %v539 = vrot.slane %v434, %v538
    %vm540 = vcmask 786112
    %v541 = vsel %vm540, %v539, %v534
    %v542 = vadd.s32 %v460, 4294967200
    %v543 = vlaneseq
    %v544 = vshrl.u32 %v543, 7
    %v545 = vsub.s32 %v542, %v544
    %v546 = vrot.slane %v436, %v545
    %vm547 = vcmask 851712
    %v548 = vsel %vm547, %v546, %v541
    %v549 = vadd.s32 %v460, 4294967192
    %v550 = vlaneseq
    %v551 = vshrl.u32 %v550, 7
    %v552 = vsub.s32 %v549, %v551
    %v553 = vrot.slane %v438, %v552
    %vm554 = vcmask 917312
    %v555 = vsel %vm554, %v553, %v548
    %v556 = vadd.s32 %v460, 4294967184
    %v557 = vlaneseq
    %v558 = vshrl.u32 %v557, 7
    %v559 = vsub.s32 %v556, %v558
    %v560 = vrot.slane %v440, %v559
    %vm561 = vcmask 982912
    %v562 = vsel %vm561, %v560, %v555
    %v563 = vadd.s32 %v460, 4294967176
    %v564 = vlaneseq
    %v565 = vshrl.u32 %v564, 7
    %v566 = vsub.s32 %v563, %v565
    %v567 = vrot.slane %v442, %v566
    %vm568 = vcmask 1048512
    %v569 = vsel %vm568, %v567, %v562
    %571 = vst [vmem:[#allocation3] sm:$0x1] %v569
    // Predicated region
    $region22: #{tpu_custom_call.1} parent=1 // pred_check
      _
    $region23: #{tpu_custom_call.1} parent=1 // pred_check_branch
      %573 = sbr.rel (0) target = $region25
    $region24: #{tpu_custom_call.1} parent=1 // pred_region
      %s575 = ssub.s32 16, 16
      %576 = vsyncadd [#allocation4], %s575
      %s578 = sshll.u32 [#allocation3], 4
      %s579 = int_to_ptr.vmem [resolvable:$true] %s578
      %581 = dma.vmem_to_hbm [thread:$0]  %s579, 16, %s5, [#allocation4]
    $region25: #{tpu_custom_call.1} parent=1 // pred_fallthru
      _
    // Predicated region
    $region26: #{tpu_custom_call.1} parent=1 // pred_check
      _
    $region27: #{tpu_custom_call.1} parent=1 // pred_check_branch
      %583 = sbr.rel (0) target = $region29
    $region28: #{tpu_custom_call.1} parent=1 // pred_region
      %584 = dma.done [#allocation4], 16
    $region29: #{tpu_custom_call.1} parent=1 // pred_fallthru
      _
    %585 = vsyncpa [#allocation4], 1

</llo_original>
